<compile_context>
chip_gen: v7x
topology: tpu7x:2x2x1
jax: 0.10.0
libtpu: 0.0.40
codegen_flags: <defaults>
</compile_context>

<pallas_src>
import functools

import jax
import jax.numpy as jnp
from jax import lax
from jax.experimental import pallas as pl
from jax.experimental.pallas import tpu as pltpu

_LANE = 128
_VMEM_CAP = 48 << 20  # never request the full per-core VMEM (v7x only has 64 MiB)


def _sublane(dtype):
    # Native sublane packing: 8 rows for 32-bit, 16 for bf16/fp16, 32 for int8/fp8.
    return max(8, 32 // jnp.dtype(dtype).itemsize)


# --------------------- single-pass fused kernel (common path) ---------------------
def _eca_fused_kernel(x_ref, o_ref, *, inv_hw):
    # x_ref / o_ref: (rows_tile, HW) — each row carries its full spatial extent.
    x = x_ref[...].astype(jnp.float32)
    s = jnp.sum(x, axis=-1, keepdims=True)                # (rows_tile, 1) f32 accumulate
    scale = jnp.maximum(s * inv_hw, 0.0)                  # relu(mean)
    o_ref[...] = (x * scale).astype(o_ref.dtype)          # f32 multiply, single rounding


# ------------------- two-pass kernels (guard for very large H*W) ------------------
def _eca_reduce_kernel(x_ref, s_ref, *, hw, hw_tile, inv_hw):
    j = pl.program_id(1)

    @pl.when(j == 0)
    def _():
        s_ref[...] = jnp.zeros_like(s_ref)

    x = x_ref[...].astype(jnp.float32)
    col = lax.broadcasted_iota(jnp.int32, x.shape, 1) + j * hw_tile
    x = jnp.where(col < hw, x, 0.0)                        # mask out-of-bounds tail cols
    s_ref[...] += jnp.sum(x, axis=-1, keepdims=True)

    @pl.when(j == pl.num_programs(1) - 1)
    def _():
        s_ref[...] = jnp.maximum(s_ref[...] * inv_hw, 0.0)  # relu(mean)


def _eca_scale_kernel(x_ref, s_ref, o_ref):
    o_ref[...] = (x_ref[...].astype(jnp.float32) * s_ref[...]).astype(o_ref.dtype)


# ----------------------------------- wrapper --------------------------------------
def eca_module(x, *, target_block_bytes=4 << 20):
    """x: (B, C, H, W) NCHW.  Returns x * relu(mean(x over H,W, keepdim))."""
    B, C, H, W = x.shape
    HW = H * W
    R = B * C                              # flatten batch*channel into one row axis
    x2 = x.reshape(R, HW)                  # no spatial padding: HW is the full last dim

    itemsize = jnp.dtype(x.dtype).itemsize
    sub = _sublane(x.dtype)
    row_bytes = HW * itemsize
    inv_hw = 1.0 / HW

    if sub * row_bytes <= target_block_bytes:
        # ------------- common path: a full row's spatial extent fits one block -------------
        if R * row_bytes <= target_block_bytes:
            rows_tile = R                                   # full-dim exemption
        else:
            rows_tile = (target_block_bytes // row_bytes) // sub * sub
            rows_tile = int(min(max(sub, rows_tile), R))
        block_bytes = rows_tile * row_bytes
        vmem_limit = int(min(_VMEM_CAP, 5 * block_bytes + (2 << 20)))

        out2 = pl.pallas_call(
            functools.partial(_eca_fused_kernel, inv_hw=inv_hw),
            out_shape=jax.ShapeDtypeStruct((R, HW), x.dtype),
            grid=(pl.cdiv(R, rows_tile),),
            in_specs=[pl.BlockSpec((rows_tile, HW), lambda i: (i, 0))],
            out_specs=pl.BlockSpec((rows_tile, HW), lambda i: (i, 0)),
            compiler_params=pltpu.CompilerParams(
                dimension_semantics=("parallel",),
                vmem_limit_bytes=vmem_limit,
            ),
        )(x2)
        return out2.reshape(B, C, H, W)

    # ------------- guard path: H*W too large for one block even at min rows -------------
    hw_tile = max(_LANE, (target_block_bytes // (sub * itemsize)) // _LANE * _LANE)
    hw_tile = int(min(hw_tile, pl.cdiv(HW, _LANE) * _LANE))   # multiple of 128
    rows_tile = (target_block_bytes // (hw_tile * itemsize)) // sub * sub
    rows_tile = int(min(max(sub, rows_tile), R))
    block_bytes = rows_tile * hw_tile * itemsize
    vmem_limit = int(min(_VMEM_CAP, 6 * block_bytes + (2 << 20)))
    grid = (pl.cdiv(R, rows_tile), pl.cdiv(HW, hw_tile))

    # Pass 1: per-row relu(mean) with the spatial axis as an "arbitrary" reduction axis.
    scale = pl.pallas_call(
        functools.partial(_eca_reduce_kernel, hw=HW, hw_tile=hw_tile, inv_hw=inv_hw),
        out_shape=jax.ShapeDtypeStruct((R, 1), jnp.float32),
        grid=grid,
        in_specs=[pl.BlockSpec((rows_tile, hw_tile), lambda i, j: (i, j))],
        out_specs=pl.BlockSpec((rows_tile, 1), lambda i, j: (i, 0)),
        compiler_params=pltpu.CompilerParams(
            dimension_semantics=("parallel", "arbitrary"),
            vmem_limit_bytes=vmem_limit,
        ),
    )(x2)

    # Pass 2: streaming elementwise scale.
    out2 = pl.pallas_call(
        _eca_scale_kernel,
        out_shape=jax.ShapeDtypeStruct((R, HW), x.dtype),
        grid=grid,
        in_specs=[
            pl.BlockSpec((rows_tile, hw_tile), lambda i, j: (i, j)),
            pl.BlockSpec((rows_tile, 1), lambda i, j: (i, 0)),
        ],
        out_specs=pl.BlockSpec((rows_tile, hw_tile), lambda i, j: (i, j)),
        compiler_params=pltpu.CompilerParams(
            dimension_semantics=("parallel", "parallel"),
            vmem_limit_bytes=vmem_limit,
        ),
    )(x2, scale)
    return out2.reshape(B, C, H, W)


def eca_reference(x):
    avg = jnp.mean(x.astype(jnp.float32), axis=(2, 3), keepdims=True)
    return (x.astype(jnp.float32) * jax.nn.relu(avg)).astype(x.dtype)


if __name__ == "__main__":
    key = jax.random.PRNGKey(0)

    # Main check: f32, (2, 4, 16, 16).
    B, C, H, W = 2, 4, 16, 16
    x = jax.random.normal(key, (B, C, H, W), dtype=jnp.float32)
    out = jax.block_until_ready(eca_module(x))
    ref = eca_reference(x)
    assert out.shape == (B, C, H, W)
    assert jnp.allclose(out, ref, atol=1e-5, rtol=1e-5)

    # Non-128-aligned H*W (7*7 = 49): no host pad/slice; masked tail store path.
    x2 = jax.random.normal(jax.random.PRNGKey(1), (2, 8, 7, 7), dtype=jnp.float32)
    out2 = jax.block_until_ready(eca_module(x2))
    assert jnp.allclose(out2, eca_reference(x2), atol=1e-5, rtol=1e-5)

    # bf16: f32 accumulate + f32 multiply, single cast on store.
    x3 = x.astype(jnp.bfloat16)
    out3 = jax.block_until_ready(eca_module(x3))
    ref3 = eca_reference(x3)
    assert jnp.allclose(out3.astype(jnp.float32), ref3.astype(jnp.float32),
                        atol=2e-2, rtol=5e-2)

    # Large-H*W guard path (forced via a tiny block budget): two-pass reduce + scale,
    # with a non-divisible spatial tiling (HW=400, hw_tile=256) exercising the tail mask.
    x4 = jax.random.normal(jax.random.PRNGKey(2), (2, 16, 20, 20), dtype=jnp.float32)
    out4 = jax.block_until_ready(eca_module(x4, target_block_bytes=8 << 10))
    assert jnp.allclose(out4, eca_reference(x4), atol=1e-5, rtol=1e-5)

    print("KERNEL_OK")
</pallas_src>

<mosaic_0001>
module attributes {stable_mosaic.version = 11 : i64} {
  func.func @_eca_fused_kernel(%arg0: i32, %arg1: memref<8x256xf32, #tpu.memory_space<vmem>>, %arg2: memref<8x256xf32, #tpu.memory_space<vmem>>) attributes {dimension_semantics = [#tpu.dimension_semantics<parallel>], iteration_bounds = array<i64: 1>, scalar_prefetch = 0 : i64, scratch_operands = 0 : i64, tpu.core_type = #tpu.core_type<tc>, window_params = [{transform_indices = @transform_0, window_bounds = array<i64: 8, 256>}, {transform_indices = @transform_1, window_bounds = array<i64: 8, 256>}]} {
    %c0 = arith.constant 0 : index
    %c0_0 = arith.constant 0 : index
    %0 = vector.load %arg1[%c0, %c0_0] : memref<8x256xf32, #tpu.memory_space<vmem>>, vector<8x256xf32>
    %cst = arith.constant dense<0.000000e+00> : vector<8xf32>
    %1 = vector.multi_reduction <add>, %0, %cst [1] : vector<8x256xf32> to vector<8xf32>
    %2 = vector.shape_cast %1 : vector<8xf32> to vector<8x1xf32>
    %cst_1 = arith.constant 3.906250e-03 : f32
    %3 = vector.broadcast %cst_1 : f32 to vector<8x1xf32>
    %4 = arith.mulf %2, %3 : vector<8x1xf32>
    %cst_2 = arith.constant 0.000000e+00 : f32
    %5 = vector.broadcast %cst_2 : f32 to vector<8x1xf32>
    %6 = arith.maximumf %4, %5 : vector<8x1xf32>
    %7 = vector.broadcast %6 : vector<8x1xf32> to vector<8x256xf32>
    %8 = arith.mulf %0, %7 : vector<8x256xf32>
    %c0_3 = arith.constant 0 : index
    %c0_4 = arith.constant 0 : index
    %9 = vector.load %arg2[%c0_3, %c0_4] : memref<8x256xf32, #tpu.memory_space<vmem>>, vector<8x256xf32>
    tpu.vector_store %arg2[%c0_3, %c0_4], %8 {strides = array<i32>} : memref<8x256xf32, #tpu.memory_space<vmem>>, vector<8x256xf32>,
    return
  }
  func.func @transform_0(%arg0: i32) -> (i32, i32) {
    %c0_i32 = arith.constant 0 : i32
    %c0_i32_0 = arith.constant 0 : i32
    return %arg0, %c0_i32 : i32, i32
  }
  func.func @transform_1(%arg0: i32) -> (i32, i32) {
    %c0_i32 = arith.constant 0 : i32
    %c0_i32_0 = arith.constant 0 : i32
    return %arg0, %c0_i32 : i32, i32
  }
}

</mosaic_0001>

<llo_original>
// kernel: tpu_custom_call.1
$region0: #{tpu_custom_call.1}
  #allocation0 [shape = 'u32[]', space=smem, size = 0x4, offset = 0x4, fixed_abs, tag = 'smem constant byte address 0x4 - core index']
  #allocation1 [shape = 'u32[144,128]{1,0:T(1,128)}', space=vmem, size = 0x12000, scoped, tag = 'internal scratch']
  %s0 = inlined_call_operand.hbm [shape: f32[8,256], index: 0, kind: input, shape index: {}]
  %s1 = inlined_call_operand.hbm [shape: f32[8,256], index: 1, kind: output, shape index: {}]
  %s2 = sld [smem:[#allocation0]]
  $region18: #{tpu_custom_call.1} parent=0
    _
  %s4 = ssub.s32 1, %s2
  %s5 = scalar_select 0, %s4, %s2
  $region1: #{tpu_custom_call.1} parent=0
    #allocation2 [shape = 'u8[8192]{0}', space=vmem, size = 0x2000, scoped, tag = 'input window, operand 0, single buffered']
    #allocation3 [shape = 's32[1]{0}', space=sflag, size = 0x4, scoped, tag = 'scoped memory for tpu_custom_call.1']
    #allocation4 [shape = 's32[1]{0}', space=sflag, size = 0x4, scoped, tag = 'scoped memory for tpu_custom_call.1']
    #allocation5 [shape = 'u8[8192]{0}', space=vmem, size = 0x2000, scoped, tag = 'output window, operand 0, single buffered']
    %6 = vsyncpa [#allocation3], 0
    %7 = vsyncpa [#allocation4], 0
    // Predicated region
    $region2: #{tpu_custom_call.1} parent=1 // pred_check
      _
    $region3: #{tpu_custom_call.1} parent=1 // pred_check_branch
      %9 = sbr.rel (0) target = $region5
    $region4: #{tpu_custom_call.1} parent=1 // pred_region
      %s11 = ssub.s32 256, 256
      %12 = vsyncadd [#allocation3], %s11
      %s14 = sshll.u32 [#allocation2], 4
      %s15 = int_to_ptr.vmem [resolvable:$true] %s14
      %17 = dma.hbm_to_vmem [thread:$0]  %s0, 256, %s15, [#allocation3]
    $region5: #{tpu_custom_call.1} parent=1 // pred_fallthru
      _
    // Predicated region
    $region6: #{tpu_custom_call.1} parent=1 // pred_check
      _
    $region7: #{tpu_custom_call.1} parent=1 // pred_check_branch
      %19 = sbr.rel (0) target = $region9
    $region8: #{tpu_custom_call.1} parent=1 // pred_region
      %20 = dma.done [#allocation3], 256
    $region9: #{tpu_custom_call.1} parent=1 // pred_fallthru
      _
    %v21 = vld [vmem:[#allocation2] sm:$0xff]
    %v22 = vld [vmem:[#allocation2 + $0x8] sm:$0xff]
    %v23 = vadd.f32 %v21, %v22
    %24 = vadd.xlane.f32.xlu0 %v23
    %v25 = vpop.xlane.xlu0 %24
    %v26 = vmul.f32 %v25, 0.00390625
    %v27 = vmax.f32 %v26, 0.0
    %v28 = vmul.f32 %v21, %v27
    %v29 = vmul.f32 %v22, %v27
    %30 = vst [vmem:[#allocation5] sm:$0xff] %v28
    %31 = vst [vmem:[#allocation5 + $0x8] sm:$0xff] %v29
    // Predicated region
    $region10: #{tpu_custom_call.1} parent=1 // pred_check
      _
    $region11: #{tpu_custom_call.1} parent=1 // pred_check_branch
      %33 = sbr.rel (0) target = $region13
    $region12: #{tpu_custom_call.1} parent=1 // pred_region
      %s35 = ssub.s32 256, 256
      %36 = vsyncadd [#allocation4], %s35
      %s38 = sshll.u32 [#allocation5], 4
      %s39 = int_to_ptr.vmem [resolvable:$true] %s38
      %41 = dma.vmem_to_hbm [thread:$0]  %s39, 256, %s1, [#allocation4]
    $region13: #{tpu_custom_call.1} parent=1 // pred_fallthru
      _
    // Predicated region
    $region14: #{tpu_custom_call.1} parent=1 // pred_check
      _
    $region15: #{tpu_custom_call.1} parent=1 // pred_check_branch
      %43 = sbr.rel (0) target = $region17
    $region16: #{tpu_custom_call.1} parent=1 // pred_region
      %44 = dma.done [#allocation4], 256
    $region17: #{tpu_custom_call.1} parent=1 // pred_fallthru
      _
    %45 = vsyncpa [#allocation3], 1
    %46 = vsyncpa [#allocation4], 1

</llo_original>
